<compile_context>
chip_gen: v5e
topology: v5e:2x2
jax: 0.10.0
libtpu: 0.0.40
codegen_flags: <defaults>
</compile_context>

<pallas_src>
import functools

import jax
import jax.numpy as jnp
import numpy as np
from jax import lax
from jax.experimental import pallas as pl
from jax.experimental.pallas import tpu as pltpu

_NEG = -1e30  # finite "-inf" sentinel (keeps inf out of VPU arithmetic)


# ------------------------------ fused kernel -------------------------------- #
def _uploss_kernel(s_ref, lbl_ref, rand_ref, out_ref, *,
                   num_classes, topk, alpha, sampling_metric):
    s = s_ref[...].astype(jnp.float32)                      # [N, K]
    n, k = s.shape
    labels = lbl_ref[...]                                   # [N, 1] int32

    # ---- hoisted iotas / masks, reused below (JAX does not CSE broadcasts) ---
    col = lax.broadcasted_iota(jnp.int32, (n, k), 1)        # class index per lane
    row_f = lax.broadcasted_iota(jnp.int32, (n, 1), 0).astype(jnp.float32)
    is_label_col = col == labels                            # [N, K]
    is_fg = labels != num_classes                           # [N, 1]

    # ---- partition bookkeeping (kept as [1,1] vreg values, no scalar extract) -
    fg_cnt = jnp.sum(is_fg.astype(jnp.float32), axis=0,
                     keepdims=True).astype(jnp.int32)       # [1,1]
    bg_cnt = jnp.int32(n) - fg_cnt
    if topk == -1:
        sample_count = fg_cnt
    else:
        sample_count = jnp.minimum(fg_cnt, jnp.int32(topk))

    # ---- per-row loss for EVERY row (selection only decides what is summed) --
    # ground-truth prob from softmax over all K columns
    m = jnp.max(s, axis=1, keepdims=True)                   # [N,1]
    e = jnp.exp(s - m)
    denom = jnp.sum(e, axis=1, keepdims=True)
    e_lbl = jnp.sum(jnp.where(is_label_col, e, 0.0), axis=1, keepdims=True)
    gt_prob = jnp.maximum(e_lbl / denom, 0.0)               # clamp(min=0)

    one_minus = 1.0 - gt_prob
    if float(alpha) == 1.0:
        powed = one_minus
    elif float(alpha) == 2.0:
        powed = one_minus * one_minus
    else:
        powed = jnp.power(one_minus, jnp.float32(alpha))
    w = gt_prob * powed                                     # uncertainty weight [N,1]

    # target column in the label-excluded coordinate system, mapped back to the
    # original column index:  orig = t + (t >= label).
    t = jnp.where(is_fg, num_classes - 2, num_classes - 1)  # [N,1]
    orig_col = t + (t >= labels).astype(jnp.int32)
    logit_t = jnp.sum(jnp.where(col == orig_col, s, 0.0), axis=1, keepdims=True)

    # label-column-excluded log-softmax with its OWN max shift: no catastrophic
    # cancellation / underflow when the label column holds the max logit.
    m_x = jnp.max(jnp.where(is_label_col, _NEG, s), axis=1, keepdims=True)
    z_x = jnp.where(is_label_col, 0.0, s - m_x)             # <= 0 everywhere
    e_x = jnp.where(is_label_col, 0.0, jnp.exp(z_x))
    lse_x = m_x + jnp.log(jnp.sum(e_x, axis=1, keepdims=True))
    per_row_loss = -w * (logit_t - lse_x)                   # [N,1]

    # ---- sampling metric over processed columns (drop column num_classes-1) --
    if sampling_metric == "max_entropy":
        keep = col != (num_classes - 1)                     # [N,K]
        m_p = jnp.max(jnp.where(keep, s, _NEG), axis=1, keepdims=True)
        z_p = jnp.where(keep, s - m_p, 0.0)                 # <= 0 where kept
        e_p = jnp.where(keep, jnp.exp(z_p), 0.0)
        d_p = jnp.sum(e_p, axis=1, keepdims=True)
        # H = -sum p log p = log(d) - sum(e*z)/d   (exact division: rank fidelity)
        metric = jnp.log(d_p) - jnp.sum(e_p * z_p, axis=1, keepdims=True) / d_p
    else:
        # "random": one uniform per row == separate fg/bg draws, in distribution.
        metric = rand_ref[...].astype(jnp.float32)          # [N,1]

    fg_metric = jnp.where(is_fg, metric, _NEG)
    bg_metric = jnp.where(is_fg, _NEG, metric)

    # ---- in-kernel top-k: pick current max, harvest its loss, mask it out ----
    def pick(metric_col):
        mx = jnp.max(metric_col, axis=0, keepdims=True)                  # [1,1]
        is_max = metric_col == mx
        first = jnp.min(jnp.where(is_max, row_f, float(n)),
                        axis=0, keepdims=True)                           # [1,1]
        picked = row_f == first                                          # [N,1]
        val = jnp.sum(jnp.where(picked, per_row_loss, 0.0),
                      axis=0, keepdims=True)                             # [1,1]
        return val, jnp.where(picked, _NEG, metric_col)

    acc = jnp.zeros((1, 1), jnp.float32)
    if topk != -1:
        # small static topk (default 3): fully unrolled selection loop.
        for p in range(min(int(topk), n)):
            val_fg, fg_metric = pick(fg_metric)
            val_bg, bg_metric = pick(bg_metric)
            ok = jnp.int32(p) < sample_count                             # [1,1]
            # TODO(synk): like the PyTorch original this assumes >= sample_count
            # background rows exist; missing picks are skipped instead of raising.
            ok_bg = jnp.logical_and(ok, jnp.int32(p) < bg_cnt)
            acc = acc + jnp.where(ok, val_fg, 0.0) + jnp.where(ok_bg, val_bg, 0.0)
    else:
        # topk == -1: every foreground row is selected; loop only for background.
        acc = jnp.sum(jnp.where(is_fg, per_row_loss, 0.0), axis=0, keepdims=True)

        def body(p, carry):
            bg_m, a = carry
            val_bg, bg_m = pick(bg_m)
            ok = jnp.logical_and(p < sample_count, p < bg_cnt)
            return bg_m, a + jnp.where(ok, val_bg, 0.0)

        _, acc = lax.fori_loop(0, n, body, (bg_metric, acc))

    # ---- normalize: loss = sum / (2 * sample_count)  (0 if nothing sampled) --
    batch = 2.0 * sample_count.astype(jnp.float32)
    out_ref[...] = jnp.where(sample_count > 0, acc / jnp.maximum(batch, 1.0), 0.0)


# ------------------------------- forward glue -------------------------------- #
def _uploss_forward(scores, labels, key, *, num_classes, sampling_metric, topk, alpha):
    n, k = scores.shape
    if k != num_classes + 1:
        raise ValueError(f"scores must have num_classes+1={num_classes + 1} "
                         f"columns, got {k}")
    labels2 = labels.astype(jnp.int32).reshape(n, 1)
    if sampling_metric == "random":
        rand = jax.random.uniform(key, (n, 1), dtype=jnp.float32)
    else:
        rand = jnp.zeros((n, 1), jnp.float32)   # unused; keeps one kernel signature

    kern = functools.partial(
        _uploss_kernel, num_classes=int(num_classes), topk=int(topk),
        alpha=float(alpha), sampling_metric=sampling_metric)

    out = pl.pallas_call(
        kern,
        grid=(1,),
        in_specs=[pl.BlockSpec((n, k), lambda i: (0, 0)),
                  pl.BlockSpec((n, 1), lambda i: (0, 0)),
                  pl.BlockSpec((n, 1), lambda i: (0, 0))],
        out_specs=pl.BlockSpec((1, 1), lambda i: (0, 0)),
        out_shape=jax.ShapeDtypeStruct((1, 1), jnp.float32),
        compiler_params=pltpu.CompilerParams(dimension_semantics=("arbitrary",)),
    )(scores, labels2, rand)
    return out[0, 0]


class UPLossPallas:
    def __init__(self, num_classes, sampling_metric="max_entropy", topk=3, alpha=1.0):
        valid = ["max_entropy", "random"]
        if sampling_metric not in valid:
            raise ValueError(f"sampling_metric must be one of {valid}")
        self.num_classes = int(num_classes)
        self.sampling_metric = sampling_metric
        self.topk = int(topk)
        self.alpha = float(alpha)
        self._fwd = jax.jit(functools.partial(
            _uploss_forward, num_classes=self.num_classes,
            sampling_metric=self.sampling_metric, topk=self.topk, alpha=self.alpha))

    def __call__(self, scores, labels, rng_key=None):
        key = jax.random.PRNGKey(0) if rng_key is None else rng_key
        return self._fwd(jnp.asarray(scores), jnp.asarray(labels), key)


# ------------------------- pure-numpy reference (check) ---------------------- #
def _uploss_reference_np(scores, labels, num_classes, topk, alpha):
    """Mirror of the PyTorch UPLoss forward (max_entropy metric), in numpy."""
    s = np.asarray(scores, dtype=np.float64)
    l = np.asarray(labels, dtype=np.int64)
    K = s.shape[1]

    fg_mask = l != num_classes
    fg_s, fg_l = s[fg_mask], l[fg_mask]
    bg_s, bg_l = s[~fg_mask], l[~fg_mask]

    def processed(x):
        return np.concatenate([x[:, :num_classes - 1], x[:, -1:]], axis=1)

    def entropy(x):
        z = x - x.max(axis=1, keepdims=True)
        e = np.exp(z)
        p = e / e.sum(axis=1, keepdims=True)
        return -(p * np.log(p)).sum(axis=1)

    fg_count = fg_s.shape[0]
    sample_count = fg_count if (topk == -1 or fg_count < topk) else topk
    if sample_count == 0:
        return 0.0

    fg_idx = np.argsort(-entropy(processed(fg_s)), kind="stable")[:sample_count]
    bg_idx = np.argsort(-entropy(processed(bg_s)), kind="stable")[:sample_count]

    cs = np.concatenate([fg_s[fg_idx], bg_s[bg_idx]], axis=0)
    cl = np.concatenate([fg_l[fg_idx], bg_l[bg_idx]], axis=0)
    B = cs.shape[0]

    cols = np.tile(np.arange(K), (B, 1))
    masked_idx = cols[cols != cl[:, None]].reshape(B, K - 1)

    sm = np.exp(cs - cs.max(axis=1, keepdims=True))
    sm = sm / sm.sum(axis=1, keepdims=True)
    gt = np.clip(sm[np.arange(B), cl], 0.0, None)

    ms = np.take_along_axis(cs, masked_idx, axis=1)
    w = gt * (1.0 - gt) ** alpha
    targets = np.zeros_like(ms)
    targets[:sample_count, num_classes - 2] = w[:sample_count]
    targets[sample_count:, num_classes - 1] = w[sample_count:]

    mmax = ms.max(axis=1, keepdims=True)
    log_probs = ms - mmax - np.log(np.exp(ms - mmax).sum(axis=1, keepdims=True))
    return float(-(targets * log_probs).sum() / B)


# ------------------------------------ main ----------------------------------- #
if __name__ == "__main__":
    num_classes = 10
    N, K = 32, num_classes + 1

    key = jax.random.PRNGKey(0)
    k_scores, k_labels = jax.random.split(key)
    scores = jax.random.normal(k_scores, (N, K), dtype=jnp.float32)

    # 24 foreground rows with known-class labels in [0, num_classes-2],
    # 8 background rows (label == num_classes).
    fg_lbl = jax.random.randint(k_labels, (24,), 0, num_classes - 1).astype(jnp.int32)
    bg_lbl = jnp.full((8,), num_classes, dtype=jnp.int32)
    labels = jnp.concatenate([fg_lbl, bg_lbl], axis=0)

    loss_fn = UPLossPallas(num_classes=num_classes,
                           sampling_metric="max_entropy", topk=3, alpha=1.0)
    loss = jax.block_until_ready(loss_fn(scores, labels))

    ref = _uploss_reference_np(np.asarray(scores), np.asarray(labels),
                               num_classes, topk=3, alpha=1.0)
    assert bool(jnp.isfinite(loss)), "loss is not finite"
    assert abs(float(loss) - ref) <= 1e-4 + 1e-3 * abs(ref), (
        f"pallas={float(loss)} vs reference={ref}")
    print("KERNEL_OK")
</pallas_src>

<mosaic_0001>
module attributes {stable_mosaic.version = 11 : i64} {
  func.func @_uploss_kernel(%arg0: i32, %arg1: memref<32x11xf32, #tpu.memory_space<vmem>>, %arg2: memref<32x1xi32, #tpu.memory_space<vmem>>, %arg3: memref<32x1xf32, #tpu.memory_space<vmem>>, %arg4: memref<1x1xf32, #tpu.memory_space<vmem>>) attributes {dimension_semantics = [#tpu.dimension_semantics<arbitrary>], iteration_bounds = array<i64: 1>, scalar_prefetch = 0 : i64, scratch_operands = 0 : i64, tpu.core_type = #tpu.core_type<tc>, window_params = [{pipeline_mode = #tpu.pipeline_mode<synchronous>, transform_indices = @transform_0, window_bounds = array<i64: 32, 11>}, {pipeline_mode = #tpu.pipeline_mode<synchronous>, transform_indices = @transform_1, window_bounds = array<i64: 32, 1>}, {pipeline_mode = #tpu.pipeline_mode<synchronous>, transform_indices = @transform_2, window_bounds = array<i64: 32, 1>}, {pipeline_mode = #tpu.pipeline_mode<synchronous>, transform_indices = @transform_3, window_bounds = array<i64: 1, 1>}]} {
    %c0 = arith.constant 0 : index
    %c0_0 = arith.constant 0 : index
    %0 = vector.load %arg1[%c0, %c0_0] : memref<32x11xf32, #tpu.memory_space<vmem>>, vector<32x11xf32>
    %c0_1 = arith.constant 0 : index
    %c0_2 = arith.constant 0 : index
    %1 = vector.load %arg2[%c0_1, %c0_2] : memref<32x1xi32, #tpu.memory_space<vmem>>, vector<32x1xi32>
    %2 = tpu.iota {dimensions = array<i32: 1>} : vector<32x11xi32>
    %3 = tpu.iota {dimensions = array<i32: 0>} : vector<32x1xi32>
    %4 = arith.sitofp %3 : vector<32x1xi32> to vector<32x1xf32>
    %5 = vector.broadcast %1 : vector<32x1xi32> to vector<32x11xi32>
    %6 = arith.cmpi eq, %2, %5 : vector<32x11xi32>
    %c10_i32 = arith.constant 10 : i32
    %7 = vector.broadcast %c10_i32 : i32 to vector<32x1xi32>
    %8 = arith.cmpi ne, %1, %7 : vector<32x1xi32>
    %9 = arith.extui %8 : vector<32x1xi1> to vector<32x1xi32>
    %10 = arith.sitofp %9 : vector<32x1xi32> to vector<32x1xf32>
    %cst = arith.constant dense<0.000000e+00> : vector<1xf32>
    %11 = vector.multi_reduction <add>, %10, %cst [0] : vector<32x1xf32> to vector<1xf32>
    %12 = vector.shape_cast %11 : vector<1xf32> to vector<1x1xf32>
    %13 = arith.fptosi %12 : vector<1x1xf32> to vector<1x1xi32>
    %c32_i32 = arith.constant 32 : i32
    %14 = vector.broadcast %c32_i32 : i32 to vector<1x1xi32>
    %15 = arith.subi %14, %13 : vector<1x1xi32>
    %c3_i32 = arith.constant 3 : i32
    %16 = vector.broadcast %c3_i32 : i32 to vector<1x1xi32>
    %17 = arith.minsi %13, %16 : vector<1x1xi32>
    %cst_3 = arith.constant dense<0xFF800000> : vector<32xf32>
    %18 = vector.multi_reduction <maximumf>, %0, %cst_3 [1] : vector<32x11xf32> to vector<32xf32>
    %19 = vector.shape_cast %18 : vector<32xf32> to vector<32x1xf32>
    %20 = vector.broadcast %19 : vector<32x1xf32> to vector<32x11xf32>
    %21 = arith.subf %0, %20 : vector<32x11xf32>
    %22 = math.exp %21 : vector<32x11xf32>
    %cst_4 = arith.constant dense<0.000000e+00> : vector<32xf32>
    %23 = vector.multi_reduction <add>, %22, %cst_4 [1] : vector<32x11xf32> to vector<32xf32>
    %24 = vector.shape_cast %23 : vector<32xf32> to vector<32x1xf32>
    %cst_5 = arith.constant 0.000000e+00 : f32
    %25 = vector.broadcast %cst_5 : f32 to vector<32x11xf32>
    %26 = arith.select %6, %22, %25 : vector<32x11xi1>, vector<32x11xf32>
    %cst_6 = arith.constant dense<0.000000e+00> : vector<32xf32>
    %27 = vector.multi_reduction <add>, %26, %cst_6 [1] : vector<32x11xf32> to vector<32xf32>
    %28 = vector.shape_cast %27 : vector<32xf32> to vector<32x1xf32>
    %29 = arith.divf %28, %24 : vector<32x1xf32>
    %cst_7 = arith.constant 0.000000e+00 : f32
    %30 = vector.broadcast %cst_7 : f32 to vector<32x1xf32>
    %31 = arith.maximumf %29, %30 : vector<32x1xf32>
    %cst_8 = arith.constant 1.000000e+00 : f32
    %32 = vector.broadcast %cst_8 : f32 to vector<32x1xf32>
    %33 = arith.subf %32, %31 : vector<32x1xf32>
    %34 = arith.mulf %31, %33 : vector<32x1xf32>
    %c8_i32 = arith.constant 8 : i32
    %c9_i32 = arith.constant 9 : i32
    %35 = vector.broadcast %c8_i32 : i32 to vector<32x1xi32>
    %36 = vector.broadcast %c9_i32 : i32 to vector<32x1xi32>
    %37 = arith.select %8, %35, %36 : vector<32x1xi1>, vector<32x1xi32>
    %38 = arith.cmpi sge, %37, %1 : vector<32x1xi32>
    %39 = arith.extui %38 : vector<32x1xi1> to vector<32x1xi32>
    %40 = arith.addi %37, %39 : vector<32x1xi32>
    %41 = vector.broadcast %40 : vector<32x1xi32> to vector<32x11xi32>
    %42 = arith.cmpi eq, %2, %41 : vector<32x11xi32>
    %cst_9 = arith.constant 0.000000e+00 : f32
    %43 = vector.broadcast %cst_9 : f32 to vector<32x11xf32>
    %44 = arith.select %42, %0, %43 : vector<32x11xi1>, vector<32x11xf32>
    %cst_10 = arith.constant dense<0.000000e+00> : vector<32xf32>
    %45 = vector.multi_reduction <add>, %44, %cst_10 [1] : vector<32x11xf32> to vector<32xf32>
    %46 = vector.shape_cast %45 : vector<32xf32> to vector<32x1xf32>
    %cst_11 = arith.constant -1.000000e+30 : f32
    %47 = vector.broadcast %cst_11 : f32 to vector<32x11xf32>
    %48 = arith.select %6, %47, %0 : vector<32x11xi1>, vector<32x11xf32>
    %cst_12 = arith.constant dense<0xFF800000> : vector<32xf32>
    %49 = vector.multi_reduction <maximumf>, %48, %cst_12 [1] : vector<32x11xf32> to vector<32xf32>
    %50 = vector.shape_cast %49 : vector<32xf32> to vector<32x1xf32>
    %51 = vector.broadcast %50 : vector<32x1xf32> to vector<32x11xf32>
    %52 = arith.subf %0, %51 : vector<32x11xf32>
    %cst_13 = arith.constant 0.000000e+00 : f32
    %53 = vector.broadcast %cst_13 : f32 to vector<32x11xf32>
    %54 = arith.select %6, %53, %52 : vector<32x11xi1>, vector<32x11xf32>
    %55 = math.exp %54 : vector<32x11xf32>
    %cst_14 = arith.constant 0.000000e+00 : f32
    %56 = vector.broadcast %cst_14 : f32 to vector<32x11xf32>
    %57 = arith.select %6, %56, %55 : vector<32x11xi1>, vector<32x11xf32>
    %cst_15 = arith.constant dense<0.000000e+00> : vector<32xf32>
    %58 = vector.multi_reduction <add>, %57, %cst_15 [1] : vector<32x11xf32> to vector<32xf32>
    %59 = vector.shape_cast %58 : vector<32xf32> to vector<32x1xf32>
    %60 = math.log %59 : vector<32x1xf32>
    %61 = arith.addf %50, %60 : vector<32x1xf32>
    %cst_16 = arith.constant 0.000000e+00 : f32
    %62 = vector.broadcast %cst_16 : f32 to vector<32x1xf32>
    %63 = arith.subf %62, %34 : vector<32x1xf32>
    %64 = arith.subf %46, %61 : vector<32x1xf32>
    %65 = arith.mulf %63, %64 : vector<32x1xf32>
    %c9_i32_17 = arith.constant 9 : i32
    %66 = vector.broadcast %c9_i32_17 : i32 to vector<32x11xi32>
    %67 = arith.cmpi ne, %2, %66 : vector<32x11xi32>
    %cst_18 = arith.constant -1.000000e+30 : f32
    %68 = vector.broadcast %cst_18 : f32 to vector<32x11xf32>
    %69 = arith.select %67, %0, %68 : vector<32x11xi1>, vector<32x11xf32>
    %cst_19 = arith.constant dense<0xFF800000> : vector<32xf32>
    %70 = vector.multi_reduction <maximumf>, %69, %cst_19 [1] : vector<32x11xf32> to vector<32xf32>
    %71 = vector.shape_cast %70 : vector<32xf32> to vector<32x1xf32>
    %72 = vector.broadcast %71 : vector<32x1xf32> to vector<32x11xf32>
    %73 = arith.subf %0, %72 : vector<32x11xf32>
    %cst_20 = arith.constant 0.000000e+00 : f32
    %74 = vector.broadcast %cst_20 : f32 to vector<32x11xf32>
    %75 = arith.select %67, %73, %74 : vector<32x11xi1>, vector<32x11xf32>
    %76 = math.exp %75 : vector<32x11xf32>
    %cst_21 = arith.constant 0.000000e+00 : f32
    %77 = vector.broadcast %cst_21 : f32 to vector<32x11xf32>
    %78 = arith.select %67, %76, %77 : vector<32x11xi1>, vector<32x11xf32>
    %cst_22 = arith.constant dense<0.000000e+00> : vector<32xf32>
    %79 = vector.multi_reduction <add>, %78, %cst_22 [1] : vector<32x11xf32> to vector<32xf32>
    %80 = vector.shape_cast %79 : vector<32xf32> to vector<32x1xf32>
    %81 = math.log %80 : vector<32x1xf32>
    %82 = arith.mulf %78, %75 : vector<32x11xf32>
    %cst_23 = arith.constant dense<0.000000e+00> : vector<32xf32>
    %83 = vector.multi_reduction <add>, %82, %cst_23 [1] : vector<32x11xf32> to vector<32xf32>
    %84 = vector.shape_cast %83 : vector<32xf32> to vector<32x1xf32>
    %85 = arith.divf %84, %80 : vector<32x1xf32>
    %86 = arith.subf %81, %85 : vector<32x1xf32>
    %cst_24 = arith.constant -1.000000e+30 : f32
    %87 = vector.broadcast %cst_24 : f32 to vector<32x1xf32>
    %88 = arith.select %8, %86, %87 : vector<32x1xi1>, vector<32x1xf32>
    %cst_25 = arith.constant -1.000000e+30 : f32
    %89 = vector.broadcast %cst_25 : f32 to vector<32x1xf32>
    %90 = arith.select %8, %89, %86 : vector<32x1xi1>, vector<32x1xf32>
    %cst_26 = arith.constant 0.000000e+00 : f32
    %91 = vector.broadcast %cst_26 : f32 to vector<1x1xf32>
    %cst_27 = arith.constant dense<0xFF800000> : vector<1xf32>
    %92 = vector.multi_reduction <maximumf>, %88, %cst_27 [0] : vector<32x1xf32> to vector<1xf32>
    %93 = vector.shape_cast %92 : vector<1xf32> to vector<1x1xf32>
    %94 = vector.broadcast %93 : vector<1x1xf32> to vector<32x1xf32>
    %95 = arith.cmpf oeq, %88, %94 : vector<32x1xf32>
    %cst_28 = arith.constant 3.200000e+01 : f32
    %96 = vector.broadcast %cst_28 : f32 to vector<32x1xf32>
    %97 = arith.select %95, %4, %96 : vector<32x1xi1>, vector<32x1xf32>
    %cst_29 = arith.constant dense<0x7F800000> : vector<1xf32>
    %98 = vector.multi_reduction <minimumf>, %97, %cst_29 [0] : vector<32x1xf32> to vector<1xf32>
    %99 = vector.shape_cast %98 : vector<1xf32> to vector<1x1xf32>
    %100 = vector.broadcast %99 : vector<1x1xf32> to vector<32x1xf32>
    %101 = arith.cmpf oeq, %4, %100 : vector<32x1xf32>
    %cst_30 = arith.constant 0.000000e+00 : f32
    %102 = vector.broadcast %cst_30 : f32 to vector<32x1xf32>
    %103 = arith.select %101, %65, %102 : vector<32x1xi1>, vector<32x1xf32>
    %cst_31 = arith.constant dense<0.000000e+00> : vector<1xf32>
    %104 = vector.multi_reduction <add>, %103, %cst_31 [0] : vector<32x1xf32> to vector<1xf32>
    %105 = vector.shape_cast %104 : vector<1xf32> to vector<1x1xf32>
    %cst_32 = arith.constant -1.000000e+30 : f32
    %106 = vector.broadcast %cst_32 : f32 to vector<32x1xf32>
    %107 = arith.select %101, %106, %88 : vector<32x1xi1>, vector<32x1xf32>
    %cst_33 = arith.constant dense<0xFF800000> : vector<1xf32>
    %108 = vector.multi_reduction <maximumf>, %90, %cst_33 [0] : vector<32x1xf32> to vector<1xf32>
    %109 = vector.shape_cast %108 : vector<1xf32> to vector<1x1xf32>
    %110 = vector.broadcast %109 : vector<1x1xf32> to vector<32x1xf32>
    %111 = arith.cmpf oeq, %90, %110 : vector<32x1xf32>
    %cst_34 = arith.constant 3.200000e+01 : f32
    %112 = vector.broadcast %cst_34 : f32 to vector<32x1xf32>
    %113 = arith.select %111, %4, %112 : vector<32x1xi1>, vector<32x1xf32>
    %cst_35 = arith.constant dense<0x7F800000> : vector<1xf32>
    %114 = vector.multi_reduction <minimumf>, %113, %cst_35 [0] : vector<32x1xf32> to vector<1xf32>
    %115 = vector.shape_cast %114 : vector<1xf32> to vector<1x1xf32>
    %116 = vector.broadcast %115 : vector<1x1xf32> to vector<32x1xf32>
    %117 = arith.cmpf oeq, %4, %116 : vector<32x1xf32>
    %cst_36 = arith.constant 0.000000e+00 : f32
    %118 = vector.broadcast %cst_36 : f32 to vector<32x1xf32>
    %119 = arith.select %117, %65, %118 : vector<32x1xi1>, vector<32x1xf32>
    %cst_37 = arith.constant dense<0.000000e+00> : vector<1xf32>
    %120 = vector.multi_reduction <add>, %119, %cst_37 [0] : vector<32x1xf32> to vector<1xf32>
    %121 = vector.shape_cast %120 : vector<1xf32> to vector<1x1xf32>
    %cst_38 = arith.constant -1.000000e+30 : f32
    %122 = vector.broadcast %cst_38 : f32 to vector<32x1xf32>
    %123 = arith.select %117, %122, %90 : vector<32x1xi1>, vector<32x1xf32>
    %c0_i32 = arith.constant 0 : i32
    %124 = vector.broadcast %c0_i32 : i32 to vector<1x1xi32>
    %125 = arith.cmpi slt, %124, %17 : vector<1x1xi32>
    %c0_i32_39 = arith.constant 0 : i32
    %126 = vector.broadcast %c0_i32_39 : i32 to vector<1x1xi32>
    %127 = arith.cmpi slt, %126, %15 : vector<1x1xi32>
    %128 = arith.andi %125, %127 : vector<1x1xi1>
    %cst_40 = arith.constant 0.000000e+00 : f32
    %129 = vector.broadcast %cst_40 : f32 to vector<1x1xf32>
    %130 = arith.select %125, %105, %129 : vector<1x1xi1>, vector<1x1xf32>
    %131 = arith.addf %91, %130 : vector<1x1xf32>
    %cst_41 = arith.constant 0.000000e+00 : f32
    %132 = vector.broadcast %cst_41 : f32 to vector<1x1xf32>
    %133 = arith.select %128, %121, %132 : vector<1x1xi1>, vector<1x1xf32>
    %134 = arith.addf %131, %133 : vector<1x1xf32>
    %cst_42 = arith.constant dense<0xFF800000> : vector<1xf32>
    %135 = vector.multi_reduction <maximumf>, %107, %cst_42 [0] : vector<32x1xf32> to vector<1xf32>
    %136 = vector.shape_cast %135 : vector<1xf32> to vector<1x1xf32>
    %137 = vector.broadcast %136 : vector<1x1xf32> to vector<32x1xf32>
    %138 = arith.cmpf oeq, %107, %137 : vector<32x1xf32>
    %cst_43 = arith.constant 3.200000e+01 : f32
    %139 = vector.broadcast %cst_43 : f32 to vector<32x1xf32>
    %140 = arith.select %138, %4, %139 : vector<32x1xi1>, vector<32x1xf32>
    %cst_44 = arith.constant dense<0x7F800000> : vector<1xf32>
    %141 = vector.multi_reduction <minimumf>, %140, %cst_44 [0] : vector<32x1xf32> to vector<1xf32>
    %142 = vector.shape_cast %141 : vector<1xf32> to vector<1x1xf32>
    %143 = vector.broadcast %142 : vector<1x1xf32> to vector<32x1xf32>
    %144 = arith.cmpf oeq, %4, %143 : vector<32x1xf32>
    %cst_45 = arith.constant 0.000000e+00 : f32
    %145 = vector.broadcast %cst_45 : f32 to vector<32x1xf32>
    %146 = arith.select %144, %65, %145 : vector<32x1xi1>, vector<32x1xf32>
    %cst_46 = arith.constant dense<0.000000e+00> : vector<1xf32>
    %147 = vector.multi_reduction <add>, %146, %cst_46 [0] : vector<32x1xf32> to vector<1xf32>
    %148 = vector.shape_cast %147 : vector<1xf32> to vector<1x1xf32>
    %cst_47 = arith.constant -1.000000e+30 : f32
    %149 = vector.broadcast %cst_47 : f32 to vector<32x1xf32>
    %150 = arith.select %144, %149, %107 : vector<32x1xi1>, vector<32x1xf32>
    %cst_48 = arith.constant dense<0xFF800000> : vector<1xf32>
    %151 = vector.multi_reduction <maximumf>, %123, %cst_48 [0] : vector<32x1xf32> to vector<1xf32>
    %152 = vector.shape_cast %151 : vector<1xf32> to vector<1x1xf32>
    %153 = vector.broadcast %152 : vector<1x1xf32> to vector<32x1xf32>
    %154 = arith.cmpf oeq, %123, %153 : vector<32x1xf32>
    %cst_49 = arith.constant 3.200000e+01 : f32
    %155 = vector.broadcast %cst_49 : f32 to vector<32x1xf32>
    %156 = arith.select %154, %4, %155 : vector<32x1xi1>, vector<32x1xf32>
    %cst_50 = arith.constant dense<0x7F800000> : vector<1xf32>
    %157 = vector.multi_reduction <minimumf>, %156, %cst_50 [0] : vector<32x1xf32> to vector<1xf32>
    %158 = vector.shape_cast %157 : vector<1xf32> to vector<1x1xf32>
    %159 = vector.broadcast %158 : vector<1x1xf32> to vector<32x1xf32>
    %160 = arith.cmpf oeq, %4, %159 : vector<32x1xf32>
    %cst_51 = arith.constant 0.000000e+00 : f32
    %161 = vector.broadcast %cst_51 : f32 to vector<32x1xf32>
    %162 = arith.select %160, %65, %161 : vector<32x1xi1>, vector<32x1xf32>
    %cst_52 = arith.constant dense<0.000000e+00> : vector<1xf32>
    %163 = vector.multi_reduction <add>, %162, %cst_52 [0] : vector<32x1xf32> to vector<1xf32>
    %164 = vector.shape_cast %163 : vector<1xf32> to vector<1x1xf32>
    %cst_53 = arith.constant -1.000000e+30 : f32
    %165 = vector.broadcast %cst_53 : f32 to vector<32x1xf32>
    %166 = arith.select %160, %165, %123 : vector<32x1xi1>, vector<32x1xf32>
    %c1_i32 = arith.constant 1 : i32
    %167 = vector.broadcast %c1_i32 : i32 to vector<1x1xi32>
    %168 = arith.cmpi slt, %167, %17 : vector<1x1xi32>
    %c1_i32_54 = arith.constant 1 : i32
    %169 = vector.broadcast %c1_i32_54 : i32 to vector<1x1xi32>
    %170 = arith.cmpi slt, %169, %15 : vector<1x1xi32>
    %171 = arith.andi %168, %170 : vector<1x1xi1>
    %cst_55 = arith.constant 0.000000e+00 : f32
    %172 = vector.broadcast %cst_55 : f32 to vector<1x1xf32>
    %173 = arith.select %168, %148, %172 : vector<1x1xi1>, vector<1x1xf32>
    %174 = arith.addf %134, %173 : vector<1x1xf32>
    %cst_56 = arith.constant 0.000000e+00 : f32
    %175 = vector.broadcast %cst_56 : f32 to vector<1x1xf32>
    %176 = arith.select %171, %164, %175 : vector<1x1xi1>, vector<1x1xf32>
    %177 = arith.addf %174, %176 : vector<1x1xf32>
    %cst_57 = arith.constant dense<0xFF800000> : vector<1xf32>
    %178 = vector.multi_reduction <maximumf>, %150, %cst_57 [0] : vector<32x1xf32> to vector<1xf32>
    %179 = vector.shape_cast %178 : vector<1xf32> to vector<1x1xf32>
    %180 = vector.broadcast %179 : vector<1x1xf32> to vector<32x1xf32>
    %181 = arith.cmpf oeq, %150, %180 : vector<32x1xf32>
    %cst_58 = arith.constant 3.200000e+01 : f32
    %182 = vector.broadcast %cst_58 : f32 to vector<32x1xf32>
    %183 = arith.select %181, %4, %182 : vector<32x1xi1>, vector<32x1xf32>
    %cst_59 = arith.constant dense<0x7F800000> : vector<1xf32>
    %184 = vector.multi_reduction <minimumf>, %183, %cst_59 [0] : vector<32x1xf32> to vector<1xf32>
    %185 = vector.shape_cast %184 : vector<1xf32> to vector<1x1xf32>
    %186 = vector.broadcast %185 : vector<1x1xf32> to vector<32x1xf32>
    %187 = arith.cmpf oeq, %4, %186 : vector<32x1xf32>
    %cst_60 = arith.constant 0.000000e+00 : f32
    %188 = vector.broadcast %cst_60 : f32 to vector<32x1xf32>
    %189 = arith.select %187, %65, %188 : vector<32x1xi1>, vector<32x1xf32>
    %cst_61 = arith.constant dense<0.000000e+00> : vector<1xf32>
    %190 = vector.multi_reduction <add>, %189, %cst_61 [0] : vector<32x1xf32> to vector<1xf32>
    %191 = vector.shape_cast %190 : vector<1xf32> to vector<1x1xf32>
    %cst_62 = arith.constant dense<0xFF800000> : vector<1xf32>
    %192 = vector.multi_reduction <maximumf>, %166, %cst_62 [0] : vector<32x1xf32> to vector<1xf32>
    %193 = vector.shape_cast %192 : vector<1xf32> to vector<1x1xf32>
    %194 = vector.broadcast %193 : vector<1x1xf32> to vector<32x1xf32>
    %195 = arith.cmpf oeq, %166, %194 : vector<32x1xf32>
    %cst_63 = arith.constant 3.200000e+01 : f32
    %196 = vector.broadcast %cst_63 : f32 to vector<32x1xf32>
    %197 = arith.select %195, %4, %196 : vector<32x1xi1>, vector<32x1xf32>
    %cst_64 = arith.constant dense<0x7F800000> : vector<1xf32>
    %198 = vector.multi_reduction <minimumf>, %197, %cst_64 [0] : vector<32x1xf32> to vector<1xf32>
    %199 = vector.shape_cast %198 : vector<1xf32> to vector<1x1xf32>
    %200 = vector.broadcast %199 : vector<1x1xf32> to vector<32x1xf32>
    %201 = arith.cmpf oeq, %4, %200 : vector<32x1xf32>
    %cst_65 = arith.constant 0.000000e+00 : f32
    %202 = vector.broadcast %cst_65 : f32 to vector<32x1xf32>
    %203 = arith.select %201, %65, %202 : vector<32x1xi1>, vector<32x1xf32>
    %cst_66 = arith.constant dense<0.000000e+00> : vector<1xf32>
    %204 = vector.multi_reduction <add>, %203, %cst_66 [0] : vector<32x1xf32> to vector<1xf32>
    %205 = vector.shape_cast %204 : vector<1xf32> to vector<1x1xf32>
    %c2_i32 = arith.constant 2 : i32
    %206 = vector.broadcast %c2_i32 : i32 to vector<1x1xi32>
    %207 = arith.cmpi slt, %206, %17 : vector<1x1xi32>
    %c2_i32_67 = arith.constant 2 : i32
    %208 = vector.broadcast %c2_i32_67 : i32 to vector<1x1xi32>
    %209 = arith.cmpi slt, %208, %15 : vector<1x1xi32>
    %210 = arith.andi %207, %209 : vector<1x1xi1>
    %cst_68 = arith.constant 0.000000e+00 : f32
    %211 = vector.broadcast %cst_68 : f32 to vector<1x1xf32>
    %212 = arith.select %207, %191, %211 : vector<1x1xi1>, vector<1x1xf32>
    %213 = arith.addf %177, %212 : vector<1x1xf32>
    %cst_69 = arith.constant 0.000000e+00 : f32
    %214 = vector.broadcast %cst_69 : f32 to vector<1x1xf32>
    %215 = arith.select %210, %205, %214 : vector<1x1xi1>, vector<1x1xf32>
    %216 = arith.addf %213, %215 : vector<1x1xf32>
    %217 = arith.sitofp %17 : vector<1x1xi32> to vector<1x1xf32>
    %cst_70 = arith.constant 2.000000e+00 : f32
    %218 = vector.broadcast %cst_70 : f32 to vector<1x1xf32>
    %219 = arith.mulf %218, %217 : vector<1x1xf32>
    %c0_i32_71 = arith.constant 0 : i32
    %220 = vector.broadcast %c0_i32_71 : i32 to vector<1x1xi32>
    %221 = arith.cmpi sgt, %17, %220 : vector<1x1xi32>
    %cst_72 = arith.constant 1.000000e+00 : f32
    %222 = vector.broadcast %cst_72 : f32 to vector<1x1xf32>
    %223 = arith.maximumf %219, %222 : vector<1x1xf32>
    %224 = arith.divf %216, %223 : vector<1x1xf32>
    %cst_73 = arith.constant 0.000000e+00 : f32
    %225 = vector.broadcast %cst_73 : f32 to vector<1x1xf32>
    %226 = arith.select %221, %224, %225 : vector<1x1xi1>, vector<1x1xf32>
    %c0_74 = arith.constant 0 : index
    %c0_75 = arith.constant 0 : index
    %227 = vector.load %arg4[%c0_74, %c0_75] : memref<1x1xf32, #tpu.memory_space<vmem>>, vector<1x1xf32>
    tpu.vector_store %arg4[%c0_74, %c0_75], %226 {strides = array<i32>} : memref<1x1xf32, #tpu.memory_space<vmem>>, vector<1x1xf32>,
    return
  }
  func.func @transform_0(%arg0: i32) -> (i32, i32) {
    %c0_i32 = arith.constant 0 : i32
    %c0_i32_0 = arith.constant 0 : i32
    %c0_i32_1 = arith.constant 0 : i32
    return %c0_i32, %c0_i32_0 : i32, i32
  }
  func.func @transform_1(%arg0: i32) -> (i32, i32) {
    %c0_i32 = arith.constant 0 : i32
    %c0_i32_0 = arith.constant 0 : i32
    %c0_i32_1 = arith.constant 0 : i32
    return %c0_i32, %c0_i32_0 : i32, i32
  }
  func.func @transform_2(%arg0: i32) -> (i32, i32) {
    %c0_i32 = arith.constant 0 : i32
    %c0_i32_0 = arith.constant 0 : i32
    %c0_i32_1 = arith.constant 0 : i32
    return %c0_i32, %c0_i32_0 : i32, i32
  }
  func.func @transform_3(%arg0: i32) -> (i32, i32) {
    %c0_i32 = arith.constant 0 : i32
    %c0_i32_0 = arith.constant 0 : i32
    %c0_i32_1 = arith.constant 0 : i32
    return %c0_i32, %c0_i32_0 : i32, i32
  }
}

</mosaic_0001>

<llo_original>
// kernel: _uploss_forward.1
$region0: #{_uploss_forward.1}
  #allocation0 [shape = 'u32[]', space=smem, size = 0x4, offset = 0x4, fixed_abs, tag = 'smem constant byte address 0x4 - core index']
  #allocation1 [shape = 'u32[72,128]{1,0:T(1,128)}', space=vmem, size = 0x9000, scoped, tag = 'internal scratch']
  %s0 = inlined_call_operand.vmem [shape: f32[32,11], index: 0, kind: input, shape index: {}]
  %s1 = inlined_call_operand.vmem [shape: s32[32,1], index: 1, kind: input, shape index: {}]
  %s2 = inlined_call_operand.vmem [shape: f32[32,1], index: 2, kind: input, shape index: {}]
  %s3 = inlined_call_operand.hbm [shape: f32[1,1], index: 3, kind: output, shape index: {}]
  %s4 = sld [smem:[#allocation0]]
  $region22: #{_uploss_forward.1} parent=0
    _
  %s6 = ssub.s32 1, %s4
  %s7 = scalar_select 0, %s6, %s4
  $region1: #{_uploss_forward.1} parent=0
    #allocation2 [shape = 'u8[512]{0}', space=vmem, size = 0x400, scoped, tag = 'output window, operand 0, single buffered']
    #allocation3 [shape = 's32[1]{0}', space=sflag, size = 0x4, scoped, tag = 'scoped memory for _uploss_forward.1']
    %8 = vsyncpa [#allocation3], 0
    // Predicated region
    $region2: #{_uploss_forward.1} parent=1 // pred_check
      _
    $region3: #{_uploss_forward.1} parent=1 // pred_check_branch
      %10 = sbr.rel (0) target = $region5
    $region4: #{_uploss_forward.1} parent=1 // pred_region
      _
    $region5: #{_uploss_forward.1} parent=1 // pred_fallthru
      _
    // Predicated region
    $region6: #{_uploss_forward.1} parent=1 // pred_check
      _
    $region7: #{_uploss_forward.1} parent=1 // pred_check_branch
      %12 = sbr.rel (0) target = $region9
    $region8: #{_uploss_forward.1} parent=1 // pred_region
      _
    $region9: #{_uploss_forward.1} parent=1 // pred_fallthru
      _
    // Predicated region
    $region10: #{_uploss_forward.1} parent=1 // pred_check
      _
    $region11: #{_uploss_forward.1} parent=1 // pred_check_branch
      %14 = sbr.rel (0) target = $region13
    $region12: #{_uploss_forward.1} parent=1 // pred_region
      _
    $region13: #{_uploss_forward.1} parent=1 // pred_fallthru
      _
    %v15 = vld [vmem:[%s0] sm:$0xff]
    %v16 = vld [vmem:[%s0 + $0x8] sm:$0xff]
    %v17 = vld [vmem:[%s0 + $0x10] sm:$0xff]
    %v18 = vld [vmem:[%s0 + $0x18] sm:$0xff]
    %v19 = vld [vmem:[%s1] sm:$0xff]
    %v20 = vld [vmem:[%s1 + $0x8] sm:$0xff]
    %v21 = vld [vmem:[%s1 + $0x10] sm:$0xff]
    %v22 = vld [vmem:[%s1 + $0x18] sm:$0xff]
    %v23 = vlaneseq
    %v24 = vand.u32 %v23, 127
    %v25 = vlaneseq
    %v26 = vshrl.u32 %v25, 7
    %v27 = vadd.s32 %v26, 8
    %v28 = vadd.s32 %v26, 16
    %v29 = vadd.s32 %v26, 24
    %v30 = vcvt.s32.f32 %v26
    %v31 = vcvt.s32.f32 %v27
    %v32 = vcvt.s32.f32 %v28
    %v33 = vcvt.s32.f32 %v29
    %34 = vset.pattern.permute.xlu0 0
    %35 = vperm.xlu0 %34, %v19
    %v36 = vpop.permute.xlu0 %35
    %37 = vset.pattern.permute.xlu0 0
    %38 = vperm.xlu0 %37, %v20
    %v39 = vpop.permute.xlu0 %38
    %40 = vset.pattern.permute.xlu0 0
    %41 = vperm.xlu0 %40, %v21
    %v42 = vpop.permute.xlu0 %41
    %43 = vset.pattern.permute.xlu0 0
    %44 = vperm.xlu0 %43, %v22
    %v45 = vpop.permute.xlu0 %44
    %vm46 = vcmp.eq.s32.totalorder %v24, %v36
    %vm47 = vcmp.eq.s32.totalorder %v24, %v39
    %vm48 = vcmp.eq.s32.totalorder %v24, %v42
    %vm49 = vcmp.eq.s32.totalorder %v24, %v45
    %vm50 = vcmp.ne.s32.totalorder %v19, 10
    %vm51 = vcmp.ne.s32.totalorder %v20, 10
    %vm52 = vcmp.ne.s32.totalorder %v21, 10
    %vm53 = vcmp.ne.s32.totalorder %v22, 10
    %v54 = vsel %vm50, 1, 0
    %v55 = vsel %vm51, 1, 0
    %v56 = vsel %vm52, 1, 0
    %v57 = vsel %vm53, 1, 0
    %v58 = vcvt.s32.f32 %v54
    %v59 = vcvt.s32.f32 %v55
    %v60 = vcvt.s32.f32 %v56
    %v61 = vcvt.s32.f32 %v57
    %vm62 = vcmask 7168
    %v63 = vsel %vm62, %v58, 0.0
    %v64 = vsel %vm62, %v59, 0.0
    %v65 = vadd.f32 %v63, %v64
    %v66 = vsel %vm62, %v60, 0.0
    %v67 = vadd.f32 %v65, %v66
    %v68 = vsel %vm62, %v61, 0.0
    %v69 = vadd.f32 %v67, %v68
    %v70 = vrot.slane %v69, 4
    %v71 = vadd.f32 %v69, %v70
    %v72 = vrot.slane %v71, 2
    %v73 = vadd.f32 %v71, %v72
    %v74 = vrot.slane %v73, 1
    %v75 = vadd.f32 %v73, %v74
    %v76 = vcvt.f32.s32.to.zero.pseudo %v75
    %v77 = vsub.s32 32, %v76
    %vm78 = vcmp.lt.s32.totalorder %v76, 3
    %v79 = vsel %vm78, %v76, 3
    %vm80 = vcmask 89088
    %v81 = vsel %vm80, %v15, -inf
    %82 = vmax.xlane.f32.xlu0 %v81
    %v83 = vpop.xlane.xlu0 %82
    %v84 = vsel %vm80, %v16, -inf
    %85 = vmax.xlane.f32.xlu0 %v84
    %v86 = vpop.xlane.xlu0 %85
    %v87 = vsel %vm80, %v17, -inf
    %88 = vmax.xlane.f32.xlu0 %v87
    %v89 = vpop.xlane.xlu0 %88
    %v90 = vsel %vm80, %v18, -inf
    %91 = vmax.xlane.f32.xlu0 %v90
    %v92 = vpop.xlane.xlu0 %91
    %v93 = vsub.f32 %v15, %v83
    %v94 = vsub.f32 %v16, %v86
    %v95 = vsub.f32 %v17, %v89
    %v96 = vsub.f32 %v18, %v92
    %v97 = vmul.f32 %v93, 1.442695
    %v98 = vpow.pop %v97
    %v99 = vmul.f32 %v94, 1.442695
    %v100 = vpow.pop %v99
    %v101 = vmul.f32 %v95, 1.442695
    %v102 = vpow.pop %v101
    %v103 = vmul.f32 %v96, 1.442695
    %v104 = vpow.pop %v103
    %v105 = vsel %vm80, %v98, 0.0
    %106 = vadd.xlane.f32.xlu0 %v105
    %v107 = vpop.xlane.xlu0 %106
    %v108 = vsel %vm80, %v100, 0.0
    %109 = vadd.xlane.f32.xlu0 %v108
    %v110 = vpop.xlane.xlu0 %109
    %v111 = vsel %vm80, %v102, 0.0
    %112 = vadd.xlane.f32.xlu0 %v111
    %v113 = vpop.xlane.xlu0 %112
    %v114 = vsel %vm80, %v104, 0.0
    %115 = vadd.xlane.f32.xlu0 %v114
    %v116 = vpop.xlane.xlu0 %115
    %v117 = vsel %vm46, %v98, 0.0
    %v118 = vsel %vm47, %v100, 0.0
    %v119 = vsel %vm48, %v102, 0.0
    %v120 = vsel %vm49, %v104, 0.0
    %v121 = vsel %vm80, %v117, 0.0
    %122 = vadd.xlane.f32.xlu0 %v121
    %v123 = vpop.xlane.xlu0 %122
    %v124 = vsel %vm80, %v118, 0.0
    %125 = vadd.xlane.f32.xlu0 %v124
    %v126 = vpop.xlane.xlu0 %125
    %v127 = vsel %vm80, %v119, 0.0
    %128 = vadd.xlane.f32.xlu0 %v127
    %v129 = vpop.xlane.xlu0 %128
    %v130 = vsel %vm80, %v120, 0.0
    %131 = vadd.xlane.f32.xlu0 %v130
    %v132 = vpop.xlane.xlu0 %131
    %v133 = vrcp.pop %v107
    %v134 = vmul.f32 %v107, %v133
    %v135 = vsub.f32 1.0, %v134
    %v136 = vmul.f32 %v133, %v135
    %v137 = vadd.f32 %v133, %v136
    %vm138 = vweird.f32 %v107
    %vm139 = vweird.f32 %v133
    %vm140 = vmor %vm138, %vm139
    %v141 = vsel %vm140, %v133, %v137
    %v142 = vand.u32 2147483647, %v107
    %vm143 = vcmp.eq.f32.partialorder %v142, 8.507059e+37
    %v144 = vand.u32 %v107, 2147483648
    %v145 = vor.u32 1.1754944e-38, %v144
    %v146 = vsel %vm143, %v145, %v141
    %v147 = vmul.f32 %v123, %v146
    %v148 = vrcp.pop %v110
    %v149 = vmul.f32 %v110, %v148
    %v150 = vsub.f32 1.0, %v149
    %v151 = vmul.f32 %v148, %v150
    %v152 = vadd.f32 %v148, %v151
    %vm153 = vweird.f32 %v110
    %vm154 = vweird.f32 %v148
    %vm155 = vmor %vm153, %vm154
    %v156 = vsel %vm155, %v148, %v152
    %v157 = vand.u32 2147483647, %v110
    %vm158 = vcmp.eq.f32.partialorder %v157, 8.507059e+37
    %v159 = vand.u32 %v110, 2147483648
    %v160 = vor.u32 1.1754944e-38, %v159
    %v161 = vsel %vm158, %v160, %v156
    %v162 = vmul.f32 %v126, %v161
    %v163 = vrcp.pop %v113
    %v164 = vmul.f32 %v113, %v163
    %v165 = vsub.f32 1.0, %v164
    %v166 = vmul.f32 %v163, %v165
    %v167 = vadd.f32 %v163, %v166
    %vm168 = vweird.f32 %v113
    %vm169 = vweird.f32 %v163
    %vm170 = vmor %vm168, %vm169
    %v171 = vsel %vm170, %v163, %v167
    %v172 = vand.u32 2147483647, %v113
    %vm173 = vcmp.eq.f32.partialorder %v172, 8.507059e+37
    %v174 = vand.u32 %v113, 2147483648
    %v175 = vor.u32 1.1754944e-38, %v174
    %v176 = vsel %vm173, %v175, %v171
    %v177 = vmul.f32 %v129, %v176
    %v178 = vrcp.pop %v116
    %v179 = vmul.f32 %v116, %v178
    %v180 = vsub.f32 1.0, %v179
    %v181 = vmul.f32 %v178, %v180
    %v182 = vadd.f32 %v178, %v181
    %vm183 = vweird.f32 %v116
    %vm184 = vweird.f32 %v178
    %vm185 = vmor %vm183, %vm184
    %v186 = vsel %vm185, %v178, %v182
    %v187 = vand.u32 2147483647, %v116
    %vm188 = vcmp.eq.f32.partialorder %v187, 8.507059e+37
    %v189 = vand.u32 %v116, 2147483648
    %v190 = vor.u32 1.1754944e-38, %v189
    %v191 = vsel %vm188, %v190, %v186
    %v192 = vmul.f32 %v132, %v191
    %v193 = vmax.f32 %v147, 0.0
    %v194 = vmax.f32 %v162, 0.0
    %v195 = vmax.f32 %v177, 0.0
    %v196 = vmax.f32 %v192, 0.0
    %v197 = vsub.f32 1.0, %v193
    %v198 = vsub.f32 1.0, %v194
    %v199 = vsub.f32 1.0, %v195
    %v200 = vsub.f32 1.0, %v196
    %v201 = vmul.f32 %v193, %v197
    %v202 = vmul.f32 %v194, %v198
    %v203 = vmul.f32 %v195, %v199
    %v204 = vmul.f32 %v196, %v200
    %v205 = vsel %vm50, 8, 9
    %v206 = vsel %vm51, 8, 9
    %v207 = vsel %vm52, 8, 9
    %v208 = vsel %vm53, 8, 9
    %vm209 = vcmp.ge.s32.totalorder %v205, %v19
    %vm210 = vcmp.ge.s32.totalorder %v206, %v20
    %vm211 = vcmp.ge.s32.totalorder %v207, %v21
    %vm212 = vcmp.ge.s32.totalorder %v208, %v22
    %v213 = vsel %vm209, 1, 0
    %v214 = vsel %vm210, 1, 0
    %v215 = vsel %vm211, 1, 0
    %v216 = vsel %vm212, 1, 0
    %v217 = vadd.s32 %v205, %v213
    %v218 = vadd.s32 %v206, %v214
    %v219 = vadd.s32 %v207, %v215
    %v220 = vadd.s32 %v208, %v216
    %221 = vset.pattern.permute.xlu0 0
    %222 = vperm.xlu0 %221, %v217
    %v223 = vpop.permute.xlu0 %222
    %224 = vset.pattern.permute.xlu0 0
    %225 = vperm.xlu0 %224, %v218
    %v226 = vpop.permute.xlu0 %225
    %227 = vset.pattern.permute.xlu0 0
    %228 = vperm.xlu0 %227, %v219
    %v229 = vpop.permute.xlu0 %228
    %230 = vset.pattern.permute.xlu0 0
    %231 = vperm.xlu0 %230, %v220
    %v232 = vpop.permute.xlu0 %231
    %vm233 = vcmp.eq.s32.totalorder %v24, %v223
    %vm234 = vcmp.eq.s32.totalorder %v24, %v226
    %vm235 = vcmp.eq.s32.totalorder %v24, %v229
    %vm236 = vcmp.eq.s32.totalorder %v24, %v232
    %v237 = vsel %vm233, %v15, 0.0
    %v238 = vsel %vm234, %v16, 0.0
    %v239 = vsel %vm235, %v17, 0.0
    %v240 = vsel %vm236, %v18, 0.0
    %v241 = vsel %vm80, %v237, 0.0
    %242 = vadd.xlane.f32.xlu0 %v241
    %v243 = vpop.xlane.xlu0 %242
    %v244 = vsel %vm80, %v238, 0.0
    %245 = vadd.xlane.f32.xlu0 %v244
    %v246 = vpop.xlane.xlu0 %245
    %v247 = vsel %vm80, %v239, 0.0
    %248 = vadd.xlane.f32.xlu0 %v247
    %v249 = vpop.xlane.xlu0 %248
    %v250 = vsel %vm80, %v240, 0.0
    %251 = vadd.xlane.f32.xlu0 %v250
    %v252 = vpop.xlane.xlu0 %251
    %v253 = vsel %vm46, -1e+30, %v15
    %v254 = vsel %vm47, -1e+30, %v16
    %v255 = vsel %vm48, -1e+30, %v17
    %v256 = vsel %vm49, -1e+30, %v18
    %v257 = vsel %vm80, %v253, -inf
    %258 = vmax.xlane.f32.xlu0 %v257
    %v259 = vpop.xlane.xlu0 %258
    %v260 = vsel %vm80, %v254, -inf
    %261 = vmax.xlane.f32.xlu0 %v260
    %v262 = vpop.xlane.xlu0 %261
    %v263 = vsel %vm80, %v255, -inf
    %264 = vmax.xlane.f32.xlu0 %v263
    %v265 = vpop.xlane.xlu0 %264
    %v266 = vsel %vm80, %v256, -inf
    %267 = vmax.xlane.f32.xlu0 %v266
    %v268 = vpop.xlane.xlu0 %267
    %v269 = vsub.f32 %v15, %v259
    %v270 = vsub.f32 %v16, %v262
    %v271 = vsub.f32 %v17, %v265
    %v272 = vsub.f32 %v18, %v268
    %v273 = vsel %vm46, 0.0, %v269
    %v274 = vsel %vm47, 0.0, %v270
    %v275 = vsel %vm48, 0.0, %v271
    %v276 = vsel %vm49, 0.0, %v272
    %v277 = vmul.f32 %v273, 1.442695
    %v278 = vpow.pop %v277
    %v279 = vmul.f32 %v274, 1.442695
    %v280 = vpow.pop %v279
    %v281 = vmul.f32 %v275, 1.442695
    %v282 = vpow.pop %v281
    %v283 = vmul.f32 %v276, 1.442695
    %v284 = vpow.pop %v283
    %v285 = vsel %vm46, 0.0, %v278
    %v286 = vsel %vm47, 0.0, %v280
    %v287 = vsel %vm48, 0.0, %v282
    %v288 = vsel %vm49, 0.0, %v284
    %v289 = vsel %vm80, %v285, 0.0
    %290 = vadd.xlane.f32.xlu0 %v289
    %v291 = vpop.xlane.xlu0 %290
    %v292 = vsel %vm80, %v286, 0.0
    %293 = vadd.xlane.f32.xlu0 %v292
    %v294 = vpop.xlane.xlu0 %293
    %v295 = vsel %vm80, %v287, 0.0
    %296 = vadd.xlane.f32.xlu0 %v295
    %v297 = vpop.xlane.xlu0 %296
    %v298 = vsel %vm80, %v288, 0.0
    %299 = vadd.xlane.f32.xlu0 %v298
    %v300 = vpop.xlane.xlu0 %299
    %v301 = vlog2.pop %v291
    %v302 = vmul.f32 %v301, 0.6931472
    %v303 = vlog2.pop %v294
    %v304 = vmul.f32 %v303, 0.6931472
    %v305 = vlog2.pop %v297
    %v306 = vmul.f32 %v305, 0.6931472
    %v307 = vlog2.pop %v300
    %v308 = vmul.f32 %v307, 0.6931472
    %v309 = vadd.f32 %v259, %v302
    %v310 = vadd.f32 %v262, %v304
    %v311 = vadd.f32 %v265, %v306
    %v312 = vadd.f32 %v268, %v308
    %v313 = vsub.f32 0.0, %v201
    %v314 = vsub.f32 0.0, %v202
    %v315 = vsub.f32 0.0, %v203
    %v316 = vsub.f32 0.0, %v204
    %v317 = vsub.f32 %v243, %v309
    %v318 = vsub.f32 %v246, %v310
    %v319 = vsub.f32 %v249, %v311
    %v320 = vsub.f32 %v252, %v312
    %v321 = vmul.f32 %v313, %v317
    %v322 = vmul.f32 %v314, %v318
    %v323 = vmul.f32 %v315, %v319
    %v324 = vmul.f32 %v316, %v320
    %vm325 = vcmp.ne.s32.totalorder %v24, 9
    %v326 = vsel %vm325, %v15, -1e+30
    %v327 = vsel %vm325, %v16, -1e+30
    %v328 = vsel %vm325, %v17, -1e+30
    %v329 = vsel %vm325, %v18, -1e+30
    %v330 = vsel %vm80, %v326, -inf
    %331 = vmax.xlane.f32.xlu0 %v330
    %v332 = vpop.xlane.xlu0 %331
    %v333 = vsel %vm80, %v327, -inf
    %334 = vmax.xlane.f32.xlu0 %v333
    %v335 = vpop.xlane.xlu0 %334
    %v336 = vsel %vm80, %v328, -inf
    %337 = vmax.xlane.f32.xlu0 %v336
    %v338 = vpop.xlane.xlu0 %337
    %v339 = vsel %vm80, %v329, -inf
    %340 = vmax.xlane.f32.xlu0 %v339
    %v341 = vpop.xlane.xlu0 %340
    %v342 = vsub.f32 %v15, %v332
    %v343 = vsub.f32 %v16, %v335
    %v344 = vsub.f32 %v17, %v338
    %v345 = vsub.f32 %v18, %v341
    %v346 = vsel %vm325, %v342, 0.0
    %v347 = vsel %vm325, %v343, 0.0
    %v348 = vsel %vm325, %v344, 0.0
    %v349 = vsel %vm325, %v345, 0.0
    %v350 = vmul.f32 %v346, 1.442695
    %v351 = vpow.pop %v350
    %v352 = vmul.f32 %v347, 1.442695
    %v353 = vpow.pop %v352
    %v354 = vmul.f32 %v348, 1.442695
    %v355 = vpow.pop %v354
    %v356 = vmul.f32 %v349, 1.442695
    %v357 = vpow.pop %v356
    %v358 = vsel %vm325, %v351, 0.0
    %v359 = vsel %vm325, %v353, 0.0
    %v360 = vsel %vm325, %v355, 0.0
    %v361 = vsel %vm325, %v357, 0.0
    %v362 = vsel %vm80, %v358, 0.0
    %363 = vadd.xlane.f32.xlu0 %v362
    %v364 = vpop.xlane.xlu0 %363
    %v365 = vsel %vm80, %v359, 0.0
    %366 = vadd.xlane.f32.xlu0 %v365
    %v367 = vpop.xlane.xlu0 %366
    %v368 = vsel %vm80, %v360, 0.0
    %369 = vadd.xlane.f32.xlu0 %v368
    %v370 = vpop.xlane.xlu0 %369
    %v371 = vsel %vm80, %v361, 0.0
    %372 = vadd.xlane.f32.xlu0 %v371
    %v373 = vpop.xlane.xlu0 %372
    %v374 = vlog2.pop %v364
    %v375 = vmul.f32 %v374, 0.6931472
    %v376 = vlog2.pop %v367
    %v377 = vmul.f32 %v376, 0.6931472
    %v378 = vlog2.pop %v370
    %v379 = vmul.f32 %v378, 0.6931472
    %v380 = vlog2.pop %v373
    %v381 = vmul.f32 %v380, 0.6931472
    %v382 = vmul.f32 %v358, %v346
    %v383 = vmul.f32 %v359, %v347
    %v384 = vmul.f32 %v360, %v348
    %v385 = vmul.f32 %v361, %v349
    %v386 = vsel %vm80, %v382, 0.0
    %387 = vadd.xlane.f32.xlu0 %v386
    %v388 = vpop.xlane.xlu0 %387
    %v389 = vsel %vm80, %v383, 0.0
    %390 = vadd.xlane.f32.xlu0 %v389
    %v391 = vpop.xlane.xlu0 %390
    %v392 = vsel %vm80, %v384, 0.0
    %393 = vadd.xlane.f32.xlu0 %v392
    %v394 = vpop.xlane.xlu0 %393
    %v395 = vsel %vm80, %v385, 0.0
    %396 = vadd.xlane.f32.xlu0 %v395
    %v397 = vpop.xlane.xlu0 %396
    %v398 = vrcp.pop %v364
    %v399 = vmul.f32 %v364, %v398
    %v400 = vsub.f32 1.0, %v399
    %v401 = vmul.f32 %v398, %v400
    %v402 = vadd.f32 %v398, %v401
    %vm403 = vweird.f32 %v364
    %vm404 = vweird.f32 %v398
    %vm405 = vmor %vm403, %vm404
    %v406 = vsel %vm405, %v398, %v402
    %v407 = vand.u32 2147483647, %v364
    %vm408 = vcmp.eq.f32.partialorder %v407, 8.507059e+37
    %v409 = vand.u32 %v364, 2147483648
    %v410 = vor.u32 1.1754944e-38, %v409
    %v411 = vsel %vm408, %v410, %v406
    %v412 = vmul.f32 %v388, %v411
    %v413 = vrcp.pop %v367
    %v414 = vmul.f32 %v367, %v413
    %v415 = vsub.f32 1.0, %v414
    %v416 = vmul.f32 %v413, %v415
    %v417 = vadd.f32 %v413, %v416
    %vm418 = vweird.f32 %v367
    %vm419 = vweird.f32 %v413
    %vm420 = vmor %vm418, %vm419
    %v421 = vsel %vm420, %v413, %v417
    %v422 = vand.u32 2147483647, %v367
    %vm423 = vcmp.eq.f32.partialorder %v422, 8.507059e+37
    %v424 = vand.u32 %v367, 2147483648
    %v425 = vor.u32 1.1754944e-38, %v424
    %v426 = vsel %vm423, %v425, %v421
    %v427 = vmul.f32 %v391, %v426
    %v428 = vrcp.pop %v370
    %v429 = vmul.f32 %v370, %v428
    %v430 = vsub.f32 1.0, %v429
    %v431 = vmul.f32 %v428, %v430
    %v432 = vadd.f32 %v428, %v431
    %vm433 = vweird.f32 %v370
    %vm434 = vweird.f32 %v428
    %vm435 = vmor %vm433, %vm434
    %v436 = vsel %vm435, %v428, %v432
    %v437 = vand.u32 2147483647, %v370
    %vm438 = vcmp.eq.f32.partialorder %v437, 8.507059e+37
    %v439 = vand.u32 %v370, 2147483648
    %v440 = vor.u32 1.1754944e-38, %v439
    %v441 = vsel %vm438, %v440, %v436
    %v442 = vmul.f32 %v394, %v441
    %v443 = vrcp.pop %v373
    %v444 = vmul.f32 %v373, %v443
    %v445 = vsub.f32 1.0, %v444
    %v446 = vmul.f32 %v443, %v445
    %v447 = vadd.f32 %v443, %v446
    %vm448 = vweird.f32 %v373
    %vm449 = vweird.f32 %v443
    %vm450 = vmor %vm448, %vm449
    %v451 = vsel %vm450, %v443, %v447
    %v452 = vand.u32 2147483647, %v373
    %vm453 = vcmp.eq.f32.partialorder %v452, 8.507059e+37
    %v454 = vand.u32 %v373, 2147483648
    %v455 = vor.u32 1.1754944e-38, %v454
    %v456 = vsel %vm453, %v455, %v451
    %v457 = vmul.f32 %v397, %v456
    %v458 = vsub.f32 %v375, %v412
    %v459 = vsub.f32 %v377, %v427
    %v460 = vsub.f32 %v379, %v442
    %v461 = vsub.f32 %v381, %v457
    %v462 = vsel %vm50, %v458, -1e+30
    %v463 = vsel %vm51, %v459, -1e+30
    %v464 = vsel %vm52, %v460, -1e+30
    %v465 = vsel %vm53, %v461, -1e+30
    %v466 = vsel %vm50, -1e+30, %v458
    %v467 = vsel %vm51, -1e+30, %v459
    %v468 = vsel %vm52, -1e+30, %v460
    %v469 = vsel %vm53, -1e+30, %v461
    %v470 = vsel %vm62, %v462, -inf
    %v471 = vsel %vm62, %v463, -inf
    %v472 = vsel %vm62, %v464, -inf
    %v473 = vsel %vm62, %v465, -inf
    %v474 = vmax.f32 %v470, %v471
    %v475 = vmax.f32 %v472, %v473
    %v476 = vmax.f32 %v474, %v475
    %v477 = vrot.slane %v476, 4
    %v478 = vmax.f32 %v476, %v477
    %v479 = vrot.slane %v478, 2
    %v480 = vmax.f32 %v478, %v479
    %v481 = vrot.slane %v480, 1
    %v482 = vmax.f32 %v480, %v481
    %vm483 = vcmp.eq.f32.partialorder %v462, %v482
    %vm484 = vcmp.eq.f32.partialorder %v463, %v482
    %vm485 = vcmp.eq.f32.partialorder %v464, %v482
    %vm486 = vcmp.eq.f32.partialorder %v465, %v482
    %v487 = vsel %vm483, %v30, 32.0
    %v488 = vsel %vm484, %v31, 32.0
    %v489 = vsel %vm485, %v32, 32.0
    %v490 = vsel %vm486, %v33, 32.0
    %v491 = vsel %vm62, %v487, inf
    %v492 = vsel %vm62, %v488, inf
    %v493 = vsel %vm62, %v489, inf
    %v494 = vsel %vm62, %v490, inf
    %v495 = vmin.f32 %v491, %v492
    %v496 = vmin.f32 %v493, %v494
    %v497 = vmin.f32 %v495, %v496
    %v498 = vrot.slane %v497, 4
    %v499 = vmin.f32 %v497, %v498
    %v500 = vrot.slane %v499, 2
    %v501 = vmin.f32 %v499, %v500
    %v502 = vrot.slane %v501, 1
    %v503 = vmin.f32 %v501, %v502
    %vm504 = vcmp.eq.f32.partialorder %v30, %v503
    %vm505 = vcmp.eq.f32.partialorder %v31, %v503
    %vm506 = vcmp.eq.f32.partialorder %v32, %v503
    %vm507 = vcmp.eq.f32.partialorder %v33, %v503
    %v508 = vsel %vm504, %v321, 0.0
    %v509 = vsel %vm505, %v322, 0.0
    %v510 = vsel %vm506, %v323, 0.0
    %v511 = vsel %vm507, %v324, 0.0
    %v512 = vsel %vm62, %v508, 0.0
    %v513 = vsel %vm62, %v509, 0.0
    %v514 = vadd.f32 %v512, %v513
    %v515 = vsel %vm62, %v510, 0.0
    %v516 = vadd.f32 %v514, %v515
    %v517 = vsel %vm62, %v511, 0.0
    %v518 = vadd.f32 %v516, %v517
    %v519 = vrot.slane %v518, 4
    %v520 = vadd.f32 %v518, %v519
    %v521 = vrot.slane %v520, 2
    %v522 = vadd.f32 %v520, %v521
    %v523 = vrot.slane %v522, 1
    %v524 = vadd.f32 %v522, %v523
    %v525 = vsel %vm504, -1e+30, %v462
    %v526 = vsel %vm505, -1e+30, %v463
    %v527 = vsel %vm506, -1e+30, %v464
    %v528 = vsel %vm507, -1e+30, %v465
    %v529 = vsel %vm62, %v466, -inf
    %v530 = vsel %vm62, %v467, -inf
    %v531 = vsel %vm62, %v468, -inf
    %v532 = vsel %vm62, %v469, -inf
    %v533 = vmax.f32 %v529, %v530
    %v534 = vmax.f32 %v531, %v532
    %v535 = vmax.f32 %v533, %v534
    %v536 = vrot.slane %v535, 4
    %v537 = vmax.f32 %v535, %v536
    %v538 = vrot.slane %v537, 2
    %v539 = vmax.f32 %v537, %v538
    %v540 = vrot.slane %v539, 1
    %v541 = vmax.f32 %v539, %v540
    %vm542 = vcmp.eq.f32.partialorder %v466, %v541
    %vm543 = vcmp.eq.f32.partialorder %v467, %v541
    %vm544 = vcmp.eq.f32.partialorder %v468, %v541
    %vm545 = vcmp.eq.f32.partialorder %v469, %v541
    %v546 = vsel %vm542, %v30, 32.0
    %v547 = vsel %vm543, %v31, 32.0
    %v548 = vsel %vm544, %v32, 32.0
    %v549 = vsel %vm545, %v33, 32.0
    %v550 = vsel %vm62, %v546, inf
    %v551 = vsel %vm62, %v547, inf
    %v552 = vsel %vm62, %v548, inf
    %v553 = vsel %vm62, %v549, inf
    %v554 = vmin.f32 %v550, %v551
    %v555 = vmin.f32 %v552, %v553
    %v556 = vmin.f32 %v554, %v555
    %v557 = vrot.slane %v556, 4
    %v558 = vmin.f32 %v556, %v557
    %v559 = vrot.slane %v558, 2
    %v560 = vmin.f32 %v558, %v559
    %v561 = vrot.slane %v560, 1
    %v562 = vmin.f32 %v560, %v561
    %vm563 = vcmp.eq.f32.partialorder %v30, %v562
    %vm564 = vcmp.eq.f32.partialorder %v31, %v562
    %vm565 = vcmp.eq.f32.partialorder %v32, %v562
    %vm566 = vcmp.eq.f32.partialorder %v33, %v562
    %v567 = vsel %vm563, %v321, 0.0
    %v568 = vsel %vm564, %v322, 0.0
    %v569 = vsel %vm565, %v323, 0.0
    %v570 = vsel %vm566, %v324, 0.0
    %v571 = vsel %vm62, %v567, 0.0
    %v572 = vsel %vm62, %v568, 0.0
    %v573 = vadd.f32 %v571, %v572
    %v574 = vsel %vm62, %v569, 0.0
    %v575 = vadd.f32 %v573, %v574
    %v576 = vsel %vm62, %v570, 0.0
    %v577 = vadd.f32 %v575, %v576
    %v578 = vrot.slane %v577, 4
    %v579 = vadd.f32 %v577, %v578
    %v580 = vrot.slane %v579, 2
    %v581 = vadd.f32 %v579, %v580
    %v582 = vrot.slane %v581, 1
    %v583 = vadd.f32 %v581, %v582
    %v584 = vsel %vm563, -1e+30, %v466
    %v585 = vsel %vm564, -1e+30, %v467
    %v586 = vsel %vm565, -1e+30, %v468
    %v587 = vsel %vm566, -1e+30, %v469
    %vm588 = vcmp.gt.s32.totalorder %v79, 0
    %vm589 = vcmp.gt.s32.totalorder %v77, 0
    %vm590 = vmand %vm588, %vm589
    %v591 = vsel %vm588, %v524, 0.0
    %v592 = vadd.f32 %v591, 0.0
    %v593 = vsel %vm590, %v583, 0.0
    %v594 = vadd.f32 %v592, %v593
    %v595 = vsel %vm62, %v525, -inf
    %v596 = vsel %vm62, %v526, -inf
    %v597 = vsel %vm62, %v527, -inf
    %v598 = vsel %vm62, %v528, -inf
    %v599 = vmax.f32 %v595, %v596
    %v600 = vmax.f32 %v597, %v598
    %v601 = vmax.f32 %v599, %v600
    %v602 = vrot.slane %v601, 4
    %v603 = vmax.f32 %v601, %v602
    %v604 = vrot.slane %v603, 2
    %v605 = vmax.f32 %v603, %v604
    %v606 = vrot.slane %v605, 1
    %v607 = vmax.f32 %v605, %v606
    %vm608 = vcmp.eq.f32.partialorder %v525, %v607
    %vm609 = vcmp.eq.f32.partialorder %v526, %v607
    %vm610 = vcmp.eq.f32.partialorder %v527, %v607
    %vm611 = vcmp.eq.f32.partialorder %v528, %v607
    %v612 = vsel %vm608, %v30, 32.0
    %v613 = vsel %vm609, %v31, 32.0
    %v614 = vsel %vm610, %v32, 32.0
    %v615 = vsel %vm611, %v33, 32.0
    %v616 = vsel %vm62, %v612, inf
    %v617 = vsel %vm62, %v613, inf
    %v618 = vsel %vm62, %v614, inf
    %v619 = vsel %vm62, %v615, inf
    %v620 = vmin.f32 %v616, %v617
    %v621 = vmin.f32 %v618, %v619
    %v622 = vmin.f32 %v620, %v621
    %v623 = vrot.slane %v622, 4
    %v624 = vmin.f32 %v622, %v623
    %v625 = vrot.slane %v624, 2
    %v626 = vmin.f32 %v624, %v625
    %v627 = vrot.slane %v626, 1
    %v628 = vmin.f32 %v626, %v627
    %vm629 = vcmp.eq.f32.partialorder %v30, %v628
    %vm630 = vcmp.eq.f32.partialorder %v31, %v628
    %vm631 = vcmp.eq.f32.partialorder %v32, %v628
    %vm632 = vcmp.eq.f32.partialorder %v33, %v628
    %v633 = vsel %vm629, %v321, 0.0
    %v634 = vsel %vm630, %v322, 0.0
    %v635 = vsel %vm631, %v323, 0.0
    %v636 = vsel %vm632, %v324, 0.0
    %v637 = vsel %vm62, %v633, 0.0
    %v638 = vsel %vm62, %v634, 0.0
    %v639 = vadd.f32 %v637, %v638
    %v640 = vsel %vm62, %v635, 0.0
    %v641 = vadd.f32 %v639, %v640
    %v642 = vsel %vm62, %v636, 0.0
    %v643 = vadd.f32 %v641, %v642
    %v644 = vrot.slane %v643, 4
    %v645 = vadd.f32 %v643, %v644
    %v646 = vrot.slane %v645, 2
    %v647 = vadd.f32 %v645, %v646
    %v648 = vrot.slane %v647, 1
    %v649 = vadd.f32 %v647, %v648
    %v650 = vsel %vm629, -1e+30, %v525
    %v651 = vsel %vm630, -1e+30, %v526
    %v652 = vsel %vm631, -1e+30, %v527
    %v653 = vsel %vm632, -1e+30, %v528
    %v654 = vsel %vm62, %v584, -inf
    %v655 = vsel %vm62, %v585, -inf
    %v656 = vsel %vm62, %v586, -inf
    %v657 = vsel %vm62, %v587, -inf
    %v658 = vmax.f32 %v654, %v655
    %v659 = vmax.f32 %v656, %v657
    %v660 = vmax.f32 %v658, %v659
    %v661 = vrot.slane %v660, 4
    %v662 = vmax.f32 %v660, %v661
    %v663 = vrot.slane %v662, 2
    %v664 = vmax.f32 %v662, %v663
    %v665 = vrot.slane %v664, 1
    %v666 = vmax.f32 %v664, %v665
    %vm667 = vcmp.eq.f32.partialorder %v584, %v666
    %vm668 = vcmp.eq.f32.partialorder %v585, %v666
    %vm669 = vcmp.eq.f32.partialorder %v586, %v666
    %vm670 = vcmp.eq.f32.partialorder %v587, %v666
    %v671 = vsel %vm667, %v30, 32.0
    %v672 = vsel %vm668, %v31, 32.0
    %v673 = vsel %vm669, %v32, 32.0
    %v674 = vsel %vm670, %v33, 32.0
    %v675 = vsel %vm62, %v671, inf
    %v676 = vsel %vm62, %v672, inf
    %v677 = vsel %vm62, %v673, inf
    %v678 = vsel %vm62, %v674, inf
    %v679 = vmin.f32 %v675, %v676
    %v680 = vmin.f32 %v677, %v678
    %v681 = vmin.f32 %v679, %v680
    %v682 = vrot.slane %v681, 4
    %v683 = vmin.f32 %v681, %v682
    %v684 = vrot.slane %v683, 2
    %v685 = vmin.f32 %v683, %v684
    %v686 = vrot.slane %v685, 1
    %v687 = vmin.f32 %v685, %v686
    %vm688 = vcmp.eq.f32.partialorder %v30, %v687
    %vm689 = vcmp.eq.f32.partialorder %v31, %v687
    %vm690 = vcmp.eq.f32.partialorder %v32, %v687
    %vm691 = vcmp.eq.f32.partialorder %v33, %v687
    %v692 = vsel %vm688, %v321, 0.0
    %v693 = vsel %vm689, %v322, 0.0
    %v694 = vsel %vm690, %v323, 0.0
    %v695 = vsel %vm691, %v324, 0.0
    %v696 = vsel %vm62, %v692, 0.0
    %v697 = vsel %vm62, %v693, 0.0
    %v698 = vadd.f32 %v696, %v697
    %v699 = vsel %vm62, %v694, 0.0
    %v700 = vadd.f32 %v698, %v699
    %v701 = vsel %vm62, %v695, 0.0
    %v702 = vadd.f32 %v700, %v701
    %v703 = vrot.slane %v702, 4
    %v704 = vadd.f32 %v702, %v703
    %v705 = vrot.slane %v704, 2
    %v706 = vadd.f32 %v704, %v705
    %v707 = vrot.slane %v706, 1
    %v708 = vadd.f32 %v706, %v707
    %v709 = vsel %vm688, -1e+30, %v584
    %v710 = vsel %vm689, -1e+30, %v585
    %v711 = vsel %vm690, -1e+30, %v586
    %v712 = vsel %vm691, -1e+30, %v587
    %vm713 = vcmp.gt.s32.totalorder %v79, 1
    %vm714 = vcmp.gt.s32.totalorder %v77, 1
    %vm715 = vmand %vm713, %vm714
    %v716 = vsel %vm713, %v649, 0.0
    %v717 = vadd.f32 %v594, %v716
    %v718 = vsel %vm715, %v708, 0.0
    %v719 = vadd.f32 %v717, %v718
    %v720 = vsel %vm62, %v650, -inf
    %v721 = vsel %vm62, %v651, -inf
    %v722 = vsel %vm62, %v652, -inf
    %v723 = vsel %vm62, %v653, -inf
    %v724 = vmax.f32 %v720, %v721
    %v725 = vmax.f32 %v722, %v723
    %v726 = vmax.f32 %v724, %v725
    %v727 = vrot.slane %v726, 4
    %v728 = vmax.f32 %v726, %v727
    %v729 = vrot.slane %v728, 2
    %v730 = vmax.f32 %v728, %v729
    %v731 = vrot.slane %v730, 1
    %v732 = vmax.f32 %v730, %v731
    %vm733 = vcmp.eq.f32.partialorder %v650, %v732
    %vm734 = vcmp.eq.f32.partialorder %v651, %v732
    %vm735 = vcmp.eq.f32.partialorder %v652, %v732
    %vm736 = vcmp.eq.f32.partialorder %v653, %v732
    %v737 = vsel %vm733, %v30, 32.0
    %v738 = vsel %vm734, %v31, 32.0
    %v739 = vsel %vm735, %v32, 32.0
    %v740 = vsel %vm736, %v33, 32.0
    %v741 = vsel %vm62, %v737, inf
    %v742 = vsel %vm62, %v738, inf
    %v743 = vsel %vm62, %v739, inf
    %v744 = vsel %vm62, %v740, inf
    %v745 = vmin.f32 %v741, %v742
    %v746 = vmin.f32 %v743, %v744
    %v747 = vmin.f32 %v745, %v746
    %v748 = vrot.slane %v747, 4
    %v749 = vmin.f32 %v747, %v748
    %v750 = vrot.slane %v749, 2
    %v751 = vmin.f32 %v749, %v750
    %v752 = vrot.slane %v751, 1
    %v753 = vmin.f32 %v751, %v752
    %vm754 = vcmp.eq.f32.partialorder %v30, %v753
    %vm755 = vcmp.eq.f32.partialorder %v31, %v753
    %vm756 = vcmp.eq.f32.partialorder %v32, %v753
    %vm757 = vcmp.eq.f32.partialorder %v33, %v753
    %v758 = vsel %vm754, %v321, 0.0
    %v759 = vsel %vm755, %v322, 0.0
    %v760 = vsel %vm756, %v323, 0.0
    %v761 = vsel %vm757, %v324, 0.0
    %v762 = vsel %vm62, %v758, 0.0
    %v763 = vsel %vm62, %v759, 0.0
    %v764 = vadd.f32 %v762, %v763
    %v765 = vsel %vm62, %v760, 0.0
    %v766 = vadd.f32 %v764, %v765
    %v767 = vsel %vm62, %v761, 0.0
    %v768 = vadd.f32 %v766, %v767
    %v769 = vrot.slane %v768, 4
    %v770 = vadd.f32 %v768, %v769
    %v771 = vrot.slane %v770, 2
    %v772 = vadd.f32 %v770, %v771
    %v773 = vrot.slane %v772, 1
    %v774 = vadd.f32 %v772, %v773
    %v775 = vsel %vm62, %v709, -inf
    %v776 = vsel %vm62, %v710, -inf
    %v777 = vsel %vm62, %v711, -inf
    %v778 = vsel %vm62, %v712, -inf
    %v779 = vmax.f32 %v775, %v776
    %v780 = vmax.f32 %v777, %v778
    %v781 = vmax.f32 %v779, %v780
    %v782 = vrot.slane %v781, 4
    %v783 = vmax.f32 %v781, %v782
    %v784 = vrot.slane %v783, 2
    %v785 = vmax.f32 %v783, %v784
    %v786 = vrot.slane %v785, 1
    %v787 = vmax.f32 %v785, %v786
    %vm788 = vcmp.eq.f32.partialorder %v709, %v787
    %vm789 = vcmp.eq.f32.partialorder %v710, %v787
    %vm790 = vcmp.eq.f32.partialorder %v711, %v787
    %vm791 = vcmp.eq.f32.partialorder %v712, %v787
    %v792 = vsel %vm788, %v30, 32.0
    %v793 = vsel %vm789, %v31, 32.0
    %v794 = vsel %vm790, %v32, 32.0
    %v795 = vsel %vm791, %v33, 32.0
    %v796 = vsel %vm62, %v792, inf
    %v797 = vsel %vm62, %v793, inf
    %v798 = vsel %vm62, %v794, inf
    %v799 = vsel %vm62, %v795, inf
    %v800 = vmin.f32 %v796, %v797
    %v801 = vmin.f32 %v798, %v799
    %v802 = vmin.f32 %v800, %v801
    %v803 = vrot.slane %v802, 4
    %v804 = vmin.f32 %v802, %v803
    %v805 = vrot.slane %v804, 2
    %v806 = vmin.f32 %v804, %v805
    %v807 = vrot.slane %v806, 1
    %v808 = vmin.f32 %v806, %v807
    %vm809 = vcmp.eq.f32.partialorder %v30, %v808
    %vm810 = vcmp.eq.f32.partialorder %v31, %v808
    %vm811 = vcmp.eq.f32.partialorder %v32, %v808
    %vm812 = vcmp.eq.f32.partialorder %v33, %v808
    %v813 = vsel %vm809, %v321, 0.0
    %v814 = vsel %vm810, %v322, 0.0
    %v815 = vsel %vm811, %v323, 0.0
    %v816 = vsel %vm812, %v324, 0.0
    %v817 = vsel %vm62, %v813, 0.0
    %v818 = vsel %vm62, %v814, 0.0
    %v819 = vadd.f32 %v817, %v818
    %v820 = vsel %vm62, %v815, 0.0
    %v821 = vadd.f32 %v819, %v820
    %v822 = vsel %vm62, %v816, 0.0
    %v823 = vadd.f32 %v821, %v822
    %v824 = vrot.slane %v823, 4
    %v825 = vadd.f32 %v823, %v824
    %v826 = vrot.slane %v825, 2
    %v827 = vadd.f32 %v825, %v826
    %v828 = vrot.slane %v827, 1
    %v829 = vadd.f32 %v827, %v828
    %vm830 = vcmp.gt.s32.totalorder %v79, 2
    %vm831 = vcmp.gt.s32.totalorder %v77, 2
    %vm832 = vmand %vm830, %vm831
    %v833 = vsel %vm830, %v774, 0.0
    %v834 = vadd.f32 %v719, %v833
    %v835 = vsel %vm832, %v829, 0.0
    %v836 = vadd.f32 %v834, %v835
    %v837 = vcvt.s32.f32 %v79
    %v838 = vmul.f32 %v837, 2.0
    %v839 = vmax.f32 %v838, 1.0
    %v840 = vrcp.pop %v839
    %v841 = vmul.f32 %v839, %v840
    %v842 = vsub.f32 1.0, %v841
    %v843 = vmul.f32 %v840, %v842
    %v844 = vadd.f32 %v840, %v843
    %vm845 = vweird.f32 %v839
    %vm846 = vweird.f32 %v840
    %vm847 = vmor %vm845, %vm846
    %v848 = vsel %vm847, %v840, %v844
    %v849 = vand.u32 2147483647, %v839
    %vm850 = vcmp.eq.f32.partialorder %v849, 8.507059e+37
    %v851 = vand.u32 %v839, 2147483648
    %v852 = vor.u32 1.1754944e-38, %v851
    %v853 = vsel %vm850, %v852, %v848
    %v854 = vmul.f32 %v836, %v853
    %v855 = vsel %vm588, %v854, 0.0
    %vm856 = vcmask 0
    %857 = vst.msk [vmem:[#allocation2] sm:$0x1] %vm856, %v855
    // Predicated region
    $region14: #{_uploss_forward.1} parent=1 // pred_check
      _
    $region15: #{_uploss_forward.1} parent=1 // pred_check_branch
      %859 = sbr.rel (0) target = $region17
    $region16: #{_uploss_forward.1} parent=1 // pred_region
      %861 = vsyncadd [#allocation3], 0
      %s863 = sshll.u32 [#allocation2], 4
      %s864 = int_to_ptr.vmem [resolvable:$true] %s863
      %s865 = sshll.u32 %s3, 4
      %s866 = int_to_ptr.hbm [resolvable:$true] %s865
      %868 = dma.vmem_to_hbm [thread:$0]  %s864, 16, %s866, [#allocation3]
    $region17: #{_uploss_forward.1} parent=1 // pred_fallthru
      _
    // Predicated region
    $region18: #{_uploss_forward.1} parent=1 // pred_check
      _
    $region19: #{_uploss_forward.1} parent=1 // pred_check_branch
      %870 = sbr.rel (0) target = $region21
    $region20: #{_uploss_forward.1} parent=1 // pred_region
      %872 = dma.done [#allocation3], 16
    $region21: #{_uploss_forward.1} parent=1 // pred_fallthru
      _
    %873 = vsyncpa [#allocation3], 1

</llo_original>
